<compile_context>
chip_gen: v6e
topology: v6e:2x2x1
jax: 0.10.0
libtpu: 0.0.40
codegen_flags: <defaults>
</compile_context>

<pallas_src>
import functools

import jax
import jax.numpy as jnp
from jax.experimental import pallas as pl
from jax.experimental.pallas import tpu as pltpu

_MIB = 1024 * 1024


# ---------------------------------------------------------------------------
# Generation-aware VMEM budgeting.
# ---------------------------------------------------------------------------
def _vmem_limit_bytes():
    """Scoped-VMEM limit: ~80 MiB on v5e/v6e (128 MiB physical), ~40 MiB on
    v7x (64 MiB physical per TensorCore)."""
    phys = 64 * _MIB  # conservative default = smallest current generation (v7x)
    try:
        phys = int(pltpu.get_tpu_info().vmem_capacity_bytes)
    except Exception:
        pass
    return int(min(max(phys * 5 // 8, 32 * _MIB), 96 * _MIB))


# ---------------------------------------------------------------------------
# Fused single-pass kernel: resident (TB, C, T) slab -> sum, gate, scale.
# ---------------------------------------------------------------------------
def _fused_kernel(x_ref, w1_ref, b1_ref, w2_ref, b2_ref, o_ref, *, inv_t):
    x = x_ref[...]                                              # (TB, C, T) native dtype
    squeeze = jnp.sum(x.astype(jnp.float32), axis=2) * inv_t    # (TB, C) f32
    h = jnp.dot(squeeze, w1_ref[...], preferred_element_type=jnp.float32)
    h = jnp.maximum(h + b1_ref[...], 0.0)                       # (TB, R)
    z = jnp.dot(h, w2_ref[...], preferred_element_type=jnp.float32) + b2_ref[...]
    g = (1.0 / (1.0 + jnp.exp(-z))).astype(x.dtype)             # (TB, C) sigmoid
    o_ref[...] = x * g[:, :, None]


# ---------------------------------------------------------------------------
# Two-pass fallback, phase 1: streamed T-sum fused with fc1-relu-fc2-sigmoid.
# ---------------------------------------------------------------------------
def _gate_kernel(x_ref, w1_ref, b1_ref, w2_ref, b2_ref, g_ref, acc_ref,
                 *, T, t_tile):
    t = pl.program_id(1)
    nt = pl.num_programs(1)

    @pl.when(t == 0)
    def _():
        acc_ref[...] = jnp.zeros_like(acc_ref)

    rem = T % t_tile  # static
    if rem == 0:
        acc_ref[...] += jnp.sum(x_ref[...].astype(jnp.float32), axis=2)
    else:
        # Only the final (ragged) tile pays the iota/compare/select mask;
        # the steady-state loop stays a plain DMA-bound reduce.
        @pl.when(t < nt - 1)
        def _():
            acc_ref[...] += jnp.sum(x_ref[...].astype(jnp.float32), axis=2)

        @pl.when(t == nt - 1)
        def _():
            x = x_ref[...].astype(jnp.float32)
            ids = jax.lax.broadcasted_iota(jnp.int32, x.shape, 2)
            acc_ref[...] += jnp.sum(jnp.where(ids < rem, x, 0.0), axis=2)

    @pl.when(t == nt - 1)
    def _():
        squeeze = acc_ref[...] * (1.0 / T)                      # fold 1/T into one mul
        h = jnp.dot(squeeze, w1_ref[...], preferred_element_type=jnp.float32)
        h = jnp.maximum(h + b1_ref[...], 0.0)                   # (TB, R)
        z = jnp.dot(h, w2_ref[...], preferred_element_type=jnp.float32) + b2_ref[...]
        g = 1.0 / (1.0 + jnp.exp(-z))                           # (TB, C) sigmoid
        # Output block is (TB, 1, C): last two dims full -> legal for any TB.
        g_ref[...] = g[:, None, :].astype(g_ref.dtype)          # emit in x.dtype


# ---------------------------------------------------------------------------
# Two-pass fallback, phase 2: flattened (rows, T) streamed scale.
# ---------------------------------------------------------------------------
def _scale_kernel(x_ref, g_ref, o_ref):
    # (RB, tT) * (RB, 1) broadcast; gate already in x.dtype (no per-step cast).
    o_ref[...] = x_ref[...] * g_ref[...]


# ---------------------------------------------------------------------------
# Tile choosers (honor C and the VMEM budget; shrink TB first, then tT).
# ---------------------------------------------------------------------------
def _gate_tiles(B, C, T, itemsize, budget):
    TB = min(B, 8)
    tT = T if T <= 1024 else (min(T, 4096) // 128) * 128

    def need(tb, tt):
        # double-buffered native-dtype input + in-kernel f32 upcast temp
        return tb * C * tt * (2 * itemsize + 4)

    while TB > 1 and need(TB, tT) > budget:
        TB //= 2
    while tT > 128 and need(TB, tT) > budget:
        tT = max(128, ((tT // 2) // 128) * 128)
    # TODO(synk): pathologically large C with tiny T would additionally need a
    # C-tiling fallback; not implemented (unrealistic for SE channel counts).
    return TB, tT


def _scale_tiles(rows, T, itemsize, budget):
    nbuf = 5  # 3 input buffers (Buffered(3)) + 2 output buffers
    tT = T if T <= 1024 else (min(T, 4096) // 128) * 128
    RB = rows if rows <= 8 else 8
    while RB < rows and RB < 256 and nbuf * (2 * RB) * tT * itemsize <= budget:
        RB *= 2                               # stays a multiple of 8
    RB = min(RB, rows)
    while tT > 128 and nbuf * RB * tT * itemsize > budget:
        tT = max(128, ((tT // 2) // 128) * 128)
    return RB, tT


# ---------------------------------------------------------------------------
# Wrapper with fused / two-pass dispatch.
# ---------------------------------------------------------------------------
def channel_se_layer(x, w1, b1, w2, b2):
    """x: (B, C, T).  w1: (R, C), b1: (R,), w2: (C, R), b2: (C,)
    (PyTorch nn.Linear convention: weight is (out_features, in_features))."""
    B, C, T = x.shape
    R = w1.shape[0]
    itemsize = x.dtype.itemsize

    vmem_limit = _vmem_limit_bytes()
    stream_budget = vmem_limit - 4 * _MIB     # headroom for weights/acc/compiler scratch

    # Pre-transpose weights so kernels do plain row-major x @ W matmuls.
    w1_t = jnp.asarray(w1, jnp.float32).T                    # (C, R)
    w2_t = jnp.asarray(w2, jnp.float32).T                    # (R, C)
    b1_2d = jnp.asarray(b1, jnp.float32).reshape(1, R)
    b2_2d = jnp.asarray(b2, jnp.float32).reshape(1, C)

    # ---------------- Fused single-pass path ----------------
    # Per batch row: 2 in bufs + 2 out bufs (native dtype) + 1 f32 reduce temp.
    per_row = C * T * (4 * itemsize + 4)
    max_tb = stream_budget // max(per_row, 1)
    if max_tb >= 1:
        TB = int(min(B, max_tb))
        if TB >= 8:
            TB = min(64, (TB // 8) * 8)       # amortize per-step overhead
        nb = pl.cdiv(B, TB)
        return pl.pallas_call(
            functools.partial(_fused_kernel, inv_t=1.0 / T),
            out_shape=jax.ShapeDtypeStruct((B, C, T), x.dtype),
            grid_spec=pltpu.PrefetchScalarGridSpec(
                num_scalar_prefetch=0,
                grid=(nb,),
                in_specs=[
                    pl.BlockSpec((TB, C, T), lambda b: (b, 0, 0)),   # x slab
                    pl.BlockSpec((C, R), lambda b: (0, 0)),          # W1^T (resident)
                    pl.BlockSpec((1, R), lambda b: (0, 0)),          # b1
                    pl.BlockSpec((R, C), lambda b: (0, 0)),          # W2^T
                    pl.BlockSpec((1, C), lambda b: (0, 0)),          # b2
                ],
                out_specs=pl.BlockSpec((TB, C, T), lambda b: (b, 0, 0)),
            ),
            compiler_params=pltpu.CompilerParams(
                dimension_semantics=("parallel",),
                vmem_limit_bytes=vmem_limit,
            ),
        )(x, w1_t, b1_2d, w2_t, b2_2d)

    # ---------------- Two-pass streaming fallback ----------------
    # Phase 1: gates (B, 1, C) in x.dtype.
    TBg, tTg = _gate_tiles(B, C, T, itemsize, stream_budget)
    gate = pl.pallas_call(
        functools.partial(_gate_kernel, T=T, t_tile=tTg),
        out_shape=jax.ShapeDtypeStruct((B, 1, C), x.dtype),
        grid_spec=pltpu.PrefetchScalarGridSpec(
            num_scalar_prefetch=0,
            grid=(pl.cdiv(B, TBg), pl.cdiv(T, tTg)),         # reduction axis last
            in_specs=[
                pl.BlockSpec((TBg, C, tTg), lambda b, t: (b, 0, t)),   # x stream
                pl.BlockSpec((C, R), lambda b, t: (0, 0)),             # W1^T
                pl.BlockSpec((1, R), lambda b, t: (0, 0)),             # b1
                pl.BlockSpec((R, C), lambda b, t: (0, 0)),             # W2^T
                pl.BlockSpec((1, C), lambda b, t: (0, 0)),             # b2
            ],
            out_specs=pl.BlockSpec((TBg, 1, C), lambda b, t: (b, 0, 0)),
            scratch_shapes=[pltpu.VMEM((TBg, C), jnp.float32)],        # f32 accumulator
        ),
        compiler_params=pltpu.CompilerParams(
            dimension_semantics=("parallel", "arbitrary"),
            vmem_limit_bytes=vmem_limit,
        ),
    )(x, w1_t, b1_2d, w2_t, b2_2d)

    # Phase 2: streamed scale over a flattened (B*C, T) view — dense
    # sublane/lane tiles and strictly contiguous DMAs regardless of C.
    rows = B * C
    RB, tTs = _scale_tiles(rows, T, itemsize, stream_budget)
    x2d = x.reshape(rows, T)              # contiguous (free) reshapes
    g2d = gate.reshape(rows, 1)
    out2d = pl.pallas_call(
        _scale_kernel,
        out_shape=jax.ShapeDtypeStruct((rows, T), x.dtype),
        grid_spec=pltpu.PrefetchScalarGridSpec(
            num_scalar_prefetch=0,
            grid=(pl.cdiv(rows, RB), pl.cdiv(T, tTs)),
            in_specs=[
                pl.BlockSpec((RB, tTs), lambda r, t: (r, t),
                             pipeline_mode=pl.Buffered(3)),            # x stream
                pl.BlockSpec((RB, 1), lambda r, t: (r, 0)),            # gate column
            ],
            out_specs=pl.BlockSpec((RB, tTs), lambda r, t: (r, t)),
        ),
        compiler_params=pltpu.CompilerParams(
            dimension_semantics=("parallel", "parallel"),   # feeds both v7x TCs
            vmem_limit_bytes=vmem_limit,
        ),
    )(x2d, g2d)
    return out2d.reshape(B, C, T)


def reference(x, w1, b1, w2, b2):
    """Pure-JAX reference mirroring the PyTorch forward."""
    squeeze = jnp.mean(x, axis=2)                            # (B, C)
    h = jnp.maximum(squeeze @ w1.T + b1, 0.0)                # (B, R)
    g = jax.nn.sigmoid(h @ w2.T + b2)                        # (B, C)
    return x * g[:, :, None]


if __name__ == "__main__":
    # Shapes implied by the module: input (B, num_channels, T); reduced dim is 16.
    B, C, T = 2, 4, 16
    R = 16  # num_channels_reduced (hard-coded to 16 in the module's __init__)

    key = jax.random.PRNGKey(0)
    kx, kw1, kb1, kw2, kb2 = jax.random.split(key, 5)

    x = jax.random.normal(kx, (B, C, T), dtype=jnp.float32)

    # Deterministic parameter init (PyTorch Linear-style uniform bounds).
    bound1 = 1.0 / (C ** 0.5)
    w1 = jax.random.uniform(kw1, (R, C), jnp.float32, -bound1, bound1)
    b1 = jax.random.uniform(kb1, (R,), jnp.float32, -bound1, bound1)
    bound2 = 1.0 / (R ** 0.5)
    w2 = jax.random.uniform(kw2, (C, R), jnp.float32, -bound2, bound2)
    b2 = jax.random.uniform(kb2, (C,), jnp.float32, -bound2, bound2)

    out = jax.block_until_ready(channel_se_layer(x, w1, b1, w2, b2))

    ref = reference(x, w1, b1, w2, b2)
    assert out.shape == (B, C, T)
    assert jnp.allclose(out, ref, atol=1e-5, rtol=1e-5), "mismatch vs reference"

    print("KERNEL_OK")
</pallas_src>

<mosaic_0001>
module attributes {stable_mosaic.version = 11 : i64} {
  func.func @_fused_kernel(%arg0: i32, %arg1: memref<2x4x16xf32, #tpu.memory_space<vmem>>, %arg2: memref<4x16xf32, #tpu.memory_space<vmem>>, %arg3: memref<1x16xf32, #tpu.memory_space<vmem>>, %arg4: memref<16x4xf32, #tpu.memory_space<vmem>>, %arg5: memref<1x4xf32, #tpu.memory_space<vmem>>, %arg6: memref<2x4x16xf32, #tpu.memory_space<vmem>>) attributes {dimension_semantics = [#tpu.dimension_semantics<parallel>], iteration_bounds = array<i64: 1>, scalar_prefetch = 0 : i64, scratch_operands = 0 : i64, tpu.core_type = #tpu.core_type<tc>, window_params = [{transform_indices = @transform_0, window_bounds = array<i64: 2, 4, 16>}, {pipeline_mode = #tpu.pipeline_mode<synchronous>, transform_indices = @transform_1, window_bounds = array<i64: 4, 16>}, {pipeline_mode = #tpu.pipeline_mode<synchronous>, transform_indices = @transform_2, window_bounds = array<i64: 1, 16>}, {pipeline_mode = #tpu.pipeline_mode<synchronous>, transform_indices = @transform_3, window_bounds = array<i64: 16, 4>}, {pipeline_mode = #tpu.pipeline_mode<synchronous>, transform_indices = @transform_4, window_bounds = array<i64: 1, 4>}, {transform_indices = @transform_5, window_bounds = array<i64: 2, 4, 16>}]} {
    %c0 = arith.constant 0 : index
    %c0_0 = arith.constant 0 : index
    %c0_1 = arith.constant 0 : index
    %0 = vector.load %arg1[%c0, %c0_0, %c0_1] : memref<2x4x16xf32, #tpu.memory_space<vmem>>, vector<2x4x16xf32>
    %cst = arith.constant dense<0.000000e+00> : vector<2x4xf32>
    %1 = vector.multi_reduction <add>, %0, %cst [2] : vector<2x4x16xf32> to vector<2x4xf32>
    %cst_2 = arith.constant 6.250000e-02 : f32
    %2 = vector.broadcast %cst_2 : f32 to vector<2x4xf32>
    %3 = arith.mulf %1, %2 : vector<2x4xf32>
    %c0_3 = arith.constant 0 : index
    %c0_4 = arith.constant 0 : index
    %4 = vector.load %arg2[%c0_3, %c0_4] : memref<4x16xf32, #tpu.memory_space<vmem>>, vector<4x16xf32>
    %cst_5 = arith.constant dense<0.000000e+00> : vector<2x16xf32>
    %5 = tpu.matmul %3, %4, %cst_5 {dimension_numbers = #tpu.dot_dimension_numbers<[1], [0], [0], [1], [0, 0, 1, 1], [], []>} : vector<2x4xf32>, vector<4x16xf32>, vector<2x16xf32> -> vector<2x16xf32>
    %c0_6 = arith.constant 0 : index
    %c0_7 = arith.constant 0 : index
    %6 = vector.load %arg3[%c0_6, %c0_7] : memref<1x16xf32, #tpu.memory_space<vmem>>, vector<1x16xf32>
    %7 = vector.broadcast %6 : vector<1x16xf32> to vector<2x16xf32>
    %8 = arith.addf %5, %7 : vector<2x16xf32>
    %cst_8 = arith.constant 0.000000e+00 : f32
    %9 = vector.broadcast %cst_8 : f32 to vector<2x16xf32>
    %10 = arith.maximumf %8, %9 : vector<2x16xf32>
    %c0_9 = arith.constant 0 : index
    %c0_10 = arith.constant 0 : index
    %11 = vector.load %arg4[%c0_9, %c0_10] : memref<16x4xf32, #tpu.memory_space<vmem>>, vector<16x4xf32>
    %cst_11 = arith.constant dense<0.000000e+00> : vector<2x4xf32>
    %12 = tpu.matmul %10, %11, %cst_11 {dimension_numbers = #tpu.dot_dimension_numbers<[1], [0], [0], [1], [0, 0, 1, 1], [], []>} : vector<2x16xf32>, vector<16x4xf32>, vector<2x4xf32> -> vector<2x4xf32>
    %c0_12 = arith.constant 0 : index
    %c0_13 = arith.constant 0 : index
    %13 = vector.load %arg5[%c0_12, %c0_13] : memref<1x4xf32, #tpu.memory_space<vmem>>, vector<1x4xf32>
    %14 = vector.broadcast %13 : vector<1x4xf32> to vector<2x4xf32>
    %15 = arith.addf %12, %14 : vector<2x4xf32>
    %cst_14 = arith.constant 0.000000e+00 : f32
    %16 = vector.broadcast %cst_14 : f32 to vector<2x4xf32>
    %17 = arith.subf %16, %15 : vector<2x4xf32>
    %18 = math.exp %17 : vector<2x4xf32>
    %cst_15 = arith.constant 1.000000e+00 : f32
    %19 = vector.broadcast %cst_15 : f32 to vector<2x4xf32>
    %20 = arith.addf %19, %18 : vector<2x4xf32>
    %cst_16 = arith.constant 1.000000e+00 : f32
    %21 = vector.broadcast %cst_16 : f32 to vector<2x4xf32>
    %22 = arith.divf %21, %20 : vector<2x4xf32>
    %23 = vector.shape_cast %22 : vector<2x4xf32> to vector<2x4x1xf32>
    %24 = vector.broadcast %23 : vector<2x4x1xf32> to vector<2x4x16xf32>
    %25 = arith.mulf %0, %24 : vector<2x4x16xf32>
    %c0_17 = arith.constant 0 : index
    %c0_18 = arith.constant 0 : index
    %c0_19 = arith.constant 0 : index
    %26 = vector.load %arg6[%c0_17, %c0_18, %c0_19] : memref<2x4x16xf32, #tpu.memory_space<vmem>>, vector<2x4x16xf32>
    tpu.vector_store %arg6[%c0_17, %c0_18, %c0_19], %25 {strides = array<i32>} : memref<2x4x16xf32, #tpu.memory_space<vmem>>, vector<2x4x16xf32>,
    return
  }
  func.func @transform_0(%arg0: i32) -> (i32, i32, i32) {
    %c0_i32 = arith.constant 0 : i32
    %c0_i32_0 = arith.constant 0 : i32
    %c0_i32_1 = arith.constant 0 : i32
    return %arg0, %c0_i32, %c0_i32_0 : i32, i32, i32
  }
  func.func @transform_1(%arg0: i32) -> (i32, i32) {
    %c0_i32 = arith.constant 0 : i32
    %c0_i32_0 = arith.constant 0 : i32
    %c0_i32_1 = arith.constant 0 : i32
    return %c0_i32, %c0_i32_0 : i32, i32
  }
  func.func @transform_2(%arg0: i32) -> (i32, i32) {
    %c0_i32 = arith.constant 0 : i32
    %c0_i32_0 = arith.constant 0 : i32
    %c0_i32_1 = arith.constant 0 : i32
    return %c0_i32, %c0_i32_0 : i32, i32
  }
  func.func @transform_3(%arg0: i32) -> (i32, i32) {
    %c0_i32 = arith.constant 0 : i32
    %c0_i32_0 = arith.constant 0 : i32
    %c0_i32_1 = arith.constant 0 : i32
    return %c0_i32, %c0_i32_0 : i32, i32
  }
  func.func @transform_4(%arg0: i32) -> (i32, i32) {
    %c0_i32 = arith.constant 0 : i32
    %c0_i32_0 = arith.constant 0 : i32
    %c0_i32_1 = arith.constant 0 : i32
    return %c0_i32, %c0_i32_0 : i32, i32
  }
  func.func @transform_5(%arg0: i32) -> (i32, i32, i32) {
    %c0_i32 = arith.constant 0 : i32
    %c0_i32_0 = arith.constant 0 : i32
    %c0_i32_1 = arith.constant 0 : i32
    return %arg0, %c0_i32, %c0_i32_0 : i32, i32, i32
  }
}

</mosaic_0001>

<llo_original>
// kernel: tpu_custom_call.1
$region0: #{tpu_custom_call.1}
  #allocation0 [shape = 'u32[]', space=smem, size = 0x4, offset = 0x4, fixed_abs, tag = 'smem constant byte address 0x4 - core index']
  #allocation1 [shape = 'u32[144,128]{1,0:T(1,128)}', space=vmem, size = 0x12000, scoped, tag = 'internal scratch']
  %s0 = inlined_call_operand.vmem [shape: f32[2,4,16], index: 0, kind: input, shape index: {}]
  %s1 = inlined_call_operand.vmem [shape: f32[4,16], index: 1, kind: input, shape index: {}]
  %s2 = inlined_call_operand.vmem [shape: f32[1,16], index: 2, kind: input, shape index: {}]
  %s3 = inlined_call_operand.vmem [shape: f32[16,4], index: 3, kind: input, shape index: {}]
  %s4 = inlined_call_operand.vmem [shape: f32[1,4], index: 4, kind: input, shape index: {}]
  %s5 = inlined_call_operand.hbm [shape: f32[2,4,16], index: 5, kind: output, shape index: {}]
  %s6 = sld [smem:[#allocation0]]
  $region30: #{tpu_custom_call.1} parent=0
    _
  %s8 = ssub.s32 1, %s6
  %s9 = scalar_select 0, %s8, %s6
  $region1: #{tpu_custom_call.1} parent=0
    #allocation2 [shape = 'u8[4096]{0}', space=vmem, size = 0x1000, scoped, tag = 'output window, operand 0, single buffered']
    #allocation3 [shape = 's32[1]{0}', space=sflag, size = 0x4, scoped, tag = 'scoped memory for tpu_custom_call.1']
    %10 = vsyncpa [#allocation3], 0
    // Predicated region
    $region2: #{tpu_custom_call.1} parent=1 // pred_check
      _
    $region3: #{tpu_custom_call.1} parent=1 // pred_check_branch
      %12 = sbr.rel (0) target = $region5
    $region4: #{tpu_custom_call.1} parent=1 // pred_region
      _
    $region5: #{tpu_custom_call.1} parent=1 // pred_fallthru
      _
    // Predicated region
    $region6: #{tpu_custom_call.1} parent=1 // pred_check
      _
    $region7: #{tpu_custom_call.1} parent=1 // pred_check_branch
      %14 = sbr.rel (0) target = $region9
    $region8: #{tpu_custom_call.1} parent=1 // pred_region
      _
    $region9: #{tpu_custom_call.1} parent=1 // pred_fallthru
      _
    // Predicated region
    $region10: #{tpu_custom_call.1} parent=1 // pred_check
      _
    $region11: #{tpu_custom_call.1} parent=1 // pred_check_branch
      %16 = sbr.rel (0) target = $region13
    $region12: #{tpu_custom_call.1} parent=1 // pred_region
      _
    $region13: #{tpu_custom_call.1} parent=1 // pred_fallthru
      _
    // Predicated region
    $region14: #{tpu_custom_call.1} parent=1 // pred_check
      _
    $region15: #{tpu_custom_call.1} parent=1 // pred_check_branch
      %18 = sbr.rel (0) target = $region17
    $region16: #{tpu_custom_call.1} parent=1 // pred_region
      _
    $region17: #{tpu_custom_call.1} parent=1 // pred_fallthru
      _
    // Predicated region
    $region18: #{tpu_custom_call.1} parent=1 // pred_check
      _
    $region19: #{tpu_custom_call.1} parent=1 // pred_check_branch
      %20 = sbr.rel (0) target = $region21
    $region20: #{tpu_custom_call.1} parent=1 // pred_region
      _
    $region21: #{tpu_custom_call.1} parent=1 // pred_fallthru
      _
    %v21 = vld [vmem:[%s0] sm:$0xf]
    %v22 = vld [vmem:[%s0 + $0x4] sm:$0xf]
    %vm23 = vcmask 125952
    %v24 = vsel %vm23, %v21, 0.0
    %25 = vadd.xlane.f32.xlu0 %v24
    %v26 = vpop.xlane.xlu0 %25
    %v27 = vsel %vm23, %v22, 0.0
    %28 = vadd.xlane.f32.xlu0 %v27
    %v29 = vpop.xlane.xlu0 %28
    %v30 = vmul.f32 %v26, 0.0625
    %v31 = vmul.f32 %v29, 0.0625
    %v32 = vld [vmem:[%s1] sm:$0xf]
    %v33 = vld [vmem:[%s2] sm:$0x1]
    %v35 = vlaneseq
    %v36 = vshrl.u32 %v35, 7
    %v37 = vsub.s32 0, %v36
    %v38 = vrot.slane %v33, %v37
    %v42 = vlaneseq
    %v43 = vand.u32 %v42, 127
    %v44 = vlaneseq
    %v45 = vshrl.u32 %v44, 7
    %v46 = vsub.s32 %v43, %v45
    %v47 = vrot.slane %v30, %v46
    %v48 = vlaneseq
    %v49 = vshrl.u32 %v48, 7
    %v50 = vsub.s32 %v43, %v49
    %v51 = vrot.slane %v31, %v50
    %vm52 = vcmask 1041409
    %v53 = vsel %vm52, %v51, %v47
    %vm54 = vcmask 31744
    %v55 = vsel %vm54, %v53, 0
    %vm57 = vcmask 1043456
    %v59 = vsel %vm57, %v32, 0
    %61 = vmatprep.subr.mxu0 0.0
    %62 = vmatpush1.msra.mxu0 0.0
    %63 = vmatprep.subr.mxu0 0.0
    %64 = vmatpush1.msra.mxu0 0.0
    %65 = vmatprep.subr.mxu0 0.0
    %66 = vmatpush1.msra.mxu0 0.0
    %67 = vmatprep.subr.mxu0 0.0
    %68 = vmatpush1.msra.mxu0 0.0
    %69 = vmatprep.subr.mxu0 0.0
    %70 = vmatpush1.msra.mxu0 0.0
    %71 = vmatprep.subr.mxu0 0.0
    %72 = vmatpush1.msra.mxu0 0.0
    %73 = vmatprep.subr.mxu0 0.0
    %74 = vmatpush1.msra.mxu0 0.0
    %75 = vmatprep.subr.mxu0 0.0
    %76 = vmatpush1.msra.mxu0 0.0
    %77 = vmatprep.subr.mxu0 0.0
    %78 = vmatpush1.msra.mxu0 0.0
    %79 = vmatprep.subr.mxu0 0.0
    %80 = vmatpush1.msra.mxu0 0.0
    %81 = vmatprep.subr.mxu0 0.0
    %82 = vmatpush1.msra.mxu0 0.0
    %83 = vmatprep.subr.mxu0 0.0
    %84 = vmatpush1.msra.mxu0 0.0
    %85 = vmatprep.subr.mxu0 0.0
    %86 = vmatpush1.msra.mxu0 0.0
    %87 = vmatprep.subr.mxu0 0.0
    %88 = vmatpush1.msra.mxu0 0.0
    %89 = vmatprep.subr.mxu0 0.0
    %90 = vmatpush1.msra.mxu0 0.0
    %91 = vmatprep.subr.mxu0 0.0
    %92 = vmatpush1.msra.mxu0 %v59
    %93 = vmatprep.subr.mxu0 0.0
    %94 = vmatpush2.msra.mxu0 0.0
    %95 = vmatprep.subr.mxu0 0.0
    %96 = vmatpush2.msra.mxu0 0.0
    %97 = vmatprep.subr.mxu0 0.0
    %98 = vmatpush2.msra.mxu0 0.0
    %99 = vmatprep.subr.mxu0 0.0
    %100 = vmatpush2.msra.mxu0 0.0
    %101 = vmatprep.subr.mxu0 0.0
    %102 = vmatpush2.msra.mxu0 0.0
    %103 = vmatprep.subr.mxu0 0.0
    %104 = vmatpush2.msra.mxu0 0.0
    %105 = vmatprep.subr.mxu0 0.0
    %106 = vmatpush2.msra.mxu0 0.0
    %107 = vmatprep.subr.mxu0 0.0
    %108 = vmatpush2.msra.mxu0 0.0
    %109 = vmatprep.subr.mxu0 0.0
    %110 = vmatpush2.msra.mxu0 0.0
    %111 = vmatprep.subr.mxu0 0.0
    %112 = vmatpush2.msra.mxu0 0.0
    %113 = vmatprep.subr.mxu0 0.0
    %114 = vmatpush2.msra.mxu0 0.0
    %115 = vmatprep.subr.mxu0 0.0
    %116 = vmatpush2.msra.mxu0 0.0
    %117 = vmatprep.subr.mxu0 0.0
    %118 = vmatpush2.msra.mxu0 0.0
    %119 = vmatprep.subr.mxu0 0.0
    %120 = vmatpush2.msra.mxu0 0.0
    %121 = vmatprep.subr.mxu0 0.0
    %122 = vmatpush2.msra.mxu0 0.0
    %123 = vmatprep.subr.mxu0 0.0
    %124 = vmatpush2.msra.mxu0 0.0
    %125 = vmatprep.mubr.f32.mxu0 0.0
    %126 = vmatmul.mubr.f32.gmra.mxu0 %v55
    %v127 = vpop.f32.mrf.mxu0
    %v128 = vadd.f32 %v38, %v127
    %v129 = vpop.f32.mrf.mxu0
    %130 = vdwg.mxu0
    %v131 = vmax.f32 %v128, 0.0
    %v132 = vld [vmem:[%s3] sm:$0xff]
    %v133 = vld [vmem:[%s3 + $0x8] sm:$0xff]
    %v134 = vld [vmem:[%s4] sm:$0x1]
    %v136 = vlaneseq
    %v137 = vshrl.u32 %v136, 7
    %v138 = vsub.s32 0, %v137
    %v139 = vrot.slane %v134, %v138
    %vm141 = vcmask 130048
    %v143 = vsel %vm141, %v131, 0
    %145 = vmatprep.subr.mxu0 0.0
    %146 = vmatpush1.msra.mxu0 0.0
    %147 = vmatprep.subr.mxu0 0.0
    %148 = vmatpush1.msra.mxu0 0.0
    %149 = vmatprep.subr.mxu0 0.0
    %150 = vmatpush1.msra.mxu0 0.0
    %151 = vmatprep.subr.mxu0 0.0
    %152 = vmatpush1.msra.mxu0 0.0
    %153 = vmatprep.subr.mxu0 0.0
    %154 = vmatpush1.msra.mxu0 0.0
    %155 = vmatprep.subr.mxu0 0.0
    %156 = vmatpush1.msra.mxu0 0.0
    %157 = vmatprep.subr.mxu0 0.0
    %158 = vmatpush1.msra.mxu0 0.0
    %159 = vmatprep.subr.mxu0 0.0
    %160 = vmatpush1.msra.mxu0 0.0
    %161 = vmatprep.subr.mxu0 0.0
    %162 = vmatpush1.msra.mxu0 0.0
    %163 = vmatprep.subr.mxu0 0.0
    %164 = vmatpush1.msra.mxu0 0.0
    %165 = vmatprep.subr.mxu0 0.0
    %166 = vmatpush1.msra.mxu0 0.0
    %167 = vmatprep.subr.mxu0 0.0
    %168 = vmatpush1.msra.mxu0 0.0
    %169 = vmatprep.subr.mxu0 0.0
    %170 = vmatpush1.msra.mxu0 0.0
    %171 = vmatprep.subr.mxu0 0.0
    %172 = vmatpush1.msra.mxu0 0.0
    %173 = vmatprep.subr.mxu0 0.0
    %174 = vmatpush1.msra.mxu0 %v133
    %175 = vmatprep.subr.mxu0 0.0
    %176 = vmatpush1.msra.mxu0 %v132
    %177 = vmatprep.subr.mxu0 0.0
    %178 = vmatpush2.msra.mxu0 0.0
    %179 = vmatprep.subr.mxu0 0.0
    %180 = vmatpush2.msra.mxu0 0.0
    %181 = vmatprep.subr.mxu0 0.0
    %182 = vmatpush2.msra.mxu0 0.0
    %183 = vmatprep.subr.mxu0 0.0
    %184 = vmatpush2.msra.mxu0 0.0
    %185 = vmatprep.subr.mxu0 0.0
    %186 = vmatpush2.msra.mxu0 0.0
    %187 = vmatprep.subr.mxu0 0.0
    %188 = vmatpush2.msra.mxu0 0.0
    %189 = vmatprep.subr.mxu0 0.0
    %190 = vmatpush2.msra.mxu0 0.0
    %191 = vmatprep.subr.mxu0 0.0
    %192 = vmatpush2.msra.mxu0 0.0
    %193 = vmatprep.subr.mxu0 0.0
    %194 = vmatpush2.msra.mxu0 0.0
    %195 = vmatprep.subr.mxu0 0.0
    %196 = vmatpush2.msra.mxu0 0.0
    %197 = vmatprep.subr.mxu0 0.0
    %198 = vmatpush2.msra.mxu0 0.0
    %199 = vmatprep.subr.mxu0 0.0
    %200 = vmatpush2.msra.mxu0 0.0
    %201 = vmatprep.subr.mxu0 0.0
    %202 = vmatpush2.msra.mxu0 0.0
    %203 = vmatprep.subr.mxu0 0.0
    %204 = vmatpush2.msra.mxu0 0.0
    %205 = vmatprep.subr.mxu0 0.0
    %206 = vmatpush2.msra.mxu0 0.0
    %207 = vmatprep.subr.mxu0 0.0
    %208 = vmatpush2.msra.mxu0 0.0
    %209 = vmatprep.mubr.f32.mxu0 0.0
    %210 = vmatmul.mubr.f32.gmra.mxu0 %v143
    %v211 = vpop.f32.mrf.mxu0
    %v212 = vadd.f32 %v139, %v211
    %v213 = vpop.f32.mrf.mxu0
    %214 = vdwg.mxu0
    %v215 = vsub.f32 0.0, %v212
    %v216 = vmul.f32 %v215, 1.442695
    %v217 = vpow.pop %v216
    %v218 = vadd.f32 %v217, 1.0
    %v219 = vrcp.pop %v218
    %v220 = vmul.f32 1.0, %v219
    %v221 = vlaneseq
    %v222 = vshrl.u32 %v221, 7
    %v223 = vsub.s32 0, %v222
    %v224 = vrot.slane %v220, %v223
    %226 = vbcast.lane.b32.xlu0 %v224, 256
    %v227 = vpop.permute.xlu0 %226
    %v228 = vlaneseq
    %v229 = vshrl.u32 %v228, 7
    %v230 = vsub.s32 1, %v229
    %v231 = vrot.slane %v220, %v230
    %233 = vbcast.lane.b32.xlu0 %v231, 256
    %v234 = vpop.permute.xlu0 %233
    %v235 = vmul.f32 %v21, %v227
    %v236 = vmul.f32 %v22, %v234
    %237 = vst.msk [vmem:[#allocation2] sm:$0xf] %vm23, %v235
    %238 = vst.msk [vmem:[#allocation2 + $0x4] sm:$0xf] %vm23, %v236
    // Predicated region
    $region22: #{tpu_custom_call.1} parent=1 // pred_check
      _
    $region23: #{tpu_custom_call.1} parent=1 // pred_check_branch
      %240 = sbr.rel (0) target = $region25
    $region24: #{tpu_custom_call.1} parent=1 // pred_region
      %s242 = ssub.s32 128, 128
      %243 = vsyncadd [#allocation3], %s242
      %s244 = sshll.u32 [#allocation2], 4
      %s245 = int_to_ptr.vmem [resolvable:$true] %s244
      %250 = dma.vmem_to_hbm [thread:$0]  %s245, 128, %s5, [#allocation3], 64, 64, 4
    $region25: #{tpu_custom_call.1} parent=1 // pred_fallthru
      _
    // Predicated region
    $region26: #{tpu_custom_call.1} parent=1 // pred_check
      _
    $region27: #{tpu_custom_call.1} parent=1 // pred_check_branch
      %252 = sbr.rel (0) target = $region29
    $region28: #{tpu_custom_call.1} parent=1 // pred_region
      %253 = dma.done [#allocation3], 128
    $region29: #{tpu_custom_call.1} parent=1 // pred_fallthru
      _
    %254 = vsyncpa [#allocation3], 1

</llo_original>
